<compile_context>
chip_gen: v6e
topology: v6e:2x2x1
jax: 0.10.0
libtpu: 0.0.40
codegen_flags: <defaults>
</compile_context>

<pallas_src>
import functools

import jax
import jax.numpy as jnp
from jax.experimental import pallas as pl
from jax.experimental.pallas import tpu as pltpu


# Explicit scoped-VMEM limit (safe on all of v5e / v6e / v7x) and the per-step
# working-set budget used to size blocks underneath it.
_VMEM_LIMIT_BYTES = 48 * 1024 * 1024
_BLOCK_BUDGET_BYTES = 32 * 1024 * 1024


def _round_down(v, m):
    return max(m, (v // m) * m)


def _round_up(v, m):
    return ((v + m - 1) // m) * m


# --------------------------------------------------------------------------
# Kernels
# --------------------------------------------------------------------------
def _ln_channels_last_kernel(x_ref, w_ref, b_ref, o_ref, *, eps):
    # x_ref: (TM, C) -- C on the lane axis, reduction over lanes (XLU slot).
    x = x_ref[...].astype(jnp.float32)
    u = jnp.mean(x, axis=-1, keepdims=True)
    xc = x - u
    var = jnp.mean(xc * xc, axis=-1, keepdims=True)
    inv = jax.lax.rsqrt(var + eps)                    # EUP slot, ~free
    w = w_ref[...].astype(jnp.float32)                # (1, C): sublane broadcast
    b = b_ref[...].astype(jnp.float32)
    o_ref[...] = (xc * inv * w + b).astype(o_ref.dtype)


def _ln_channels_first_kernel(x_ref, w_ref, b_ref, o_ref, *, eps):
    # x_ref: (1, C, TS) -- flattened spatial axis (TS) on lanes, lane-dense.
    # Reduction is over the channel axis (sublane-major => cheap tile adds).
    x = x_ref[...].astype(jnp.float32)
    u = jnp.mean(x, axis=1, keepdims=True)            # (1, 1, TS)
    xc = x - u
    var = jnp.mean(xc * xc, axis=1, keepdims=True)
    inv = jax.lax.rsqrt(var + eps)
    w = w_ref[...].astype(jnp.float32)                # (1, C, 1): lane splat
    b = b_ref[...].astype(jnp.float32)
    o_ref[...] = (xc * inv * w + b).astype(o_ref.dtype)


# --------------------------------------------------------------------------
# Wrappers
# --------------------------------------------------------------------------
def _layer_norm_channels_last(x, weight, bias, eps):
    orig_shape = x.shape
    C = int(orig_shape[-1])
    assert weight.shape == (C,) and bias.shape == (C,)

    M = 1
    for d in orig_shape[:-1]:
        M *= int(d)
    x2 = x.reshape(M, C)
    w2 = weight.astype(jnp.float32).reshape(1, C)
    b2 = bias.astype(jnp.float32).reshape(1, C)

    # Per-element working-set bytes: double-buffered input + output blocks plus
    # ~3 live f32 temporaries (x_f32, centered, scaled) inside the kernel.
    itemsize = x.dtype.itemsize
    per_elem = 4 * itemsize + 3 * 4
    max_elems = _BLOCK_BUDGET_BYTES // per_elem
    tm = _round_down(max_elems // C, 8)
    if tm >= M:
        tm = M
        if M >= 16:
            # Split into >= 2 grid steps so both v7x TensorCores get work.
            half = _round_up((M + 1) // 2, 8)
            if half < M:
                tm = half

    # TODO(synk): for C not a multiple of 128 (e.g. ConvNeXt C=96/192) the lane
    # axis is still partially masked; a row-grouping (M,C)->(M/G, G*C) segmented
    # reduction would recover full lane density.
    grid = (pl.cdiv(M, tm),)
    kernel = functools.partial(_ln_channels_last_kernel, eps=float(eps))
    out2 = pl.pallas_call(
        kernel,
        out_shape=jax.ShapeDtypeStruct((M, C), x.dtype),
        grid=grid,
        in_specs=[
            pl.BlockSpec((tm, C), lambda i: (i, 0)),
            pl.BlockSpec((1, C), lambda i: (0, 0)),   # resident across steps
            pl.BlockSpec((1, C), lambda i: (0, 0)),
        ],
        out_specs=pl.BlockSpec((tm, C), lambda i: (i, 0)),
        compiler_params=pltpu.CompilerParams(
            dimension_semantics=("parallel",),
            vmem_limit_bytes=_VMEM_LIMIT_BYTES),
    )(x2, w2, b2)
    return out2.reshape(orig_shape)


def _layer_norm_channels_first(x, weight, bias, eps):
    orig_shape = x.shape
    assert x.ndim in (4, 5), "channels_first supports 4-D or 5-D inputs"
    B = int(orig_shape[0])
    C = int(orig_shape[1])
    assert weight.shape == (C,) and bias.shape == (C,)

    # Flatten ALL spatial dims onto the lane axis: (B, C, S).  Per-location
    # channel normalization is unchanged by this reshape, but every load/store
    # becomes lane-dense (ConvNeXt W=7..56 would otherwise waste most lanes).
    S = 1
    for d in orig_shape[2:]:
        S *= int(d)
    x3 = x.reshape(B, C, S)

    # Tiny per-channel params: pass un-broadcast as (1, C, 1); the kernel does a
    # free lane-axis splat.  No extra HBM traffic, no wide resident VMEM block.
    w3 = weight.astype(jnp.float32).reshape(1, C, 1)
    b3 = bias.astype(jnp.float32).reshape(1, C, 1)

    # Spatial tile: multiple of 128 lanes, sized from the working-set budget.
    itemsize = x.dtype.itemsize
    per_elem = 4 * itemsize + 3 * 4
    max_elems = _BLOCK_BUDGET_BYTES // per_elem
    ts = _round_down(max_elems // C, 128)
    if ts >= S:
        ts = S
        if B == 1 and S >= 256:
            # Split spatially so both v7x TensorCores get work.
            half = _round_up((S + 1) // 2, 128)
            if half < S:
                ts = half

    num_s = pl.cdiv(S, ts)
    kernel = functools.partial(_ln_channels_first_kernel, eps=float(eps))

    # Put the larger parallel axis first (better megacore sharding on v7x).
    if num_s >= B:
        grid = (num_s, B)
        x_map = lambda s, b: (b, 0, s)
    else:
        grid = (B, num_s)
        x_map = lambda b, s: (b, 0, s)
    const_map = lambda i, j: (0, 0, 0)

    out3 = pl.pallas_call(
        kernel,
        out_shape=jax.ShapeDtypeStruct((B, C, S), x.dtype),
        grid=grid,
        in_specs=[
            pl.BlockSpec((1, C, ts), x_map),
            pl.BlockSpec((1, C, 1), const_map),
            pl.BlockSpec((1, C, 1), const_map),
        ],
        out_specs=pl.BlockSpec((1, C, ts), x_map),
        compiler_params=pltpu.CompilerParams(
            dimension_semantics=("parallel", "parallel"),
            vmem_limit_bytes=_VMEM_LIMIT_BYTES),
    )(x3, w3, b3)
    return out3.reshape(orig_shape)


def layer_norm(x, weight, bias, *, eps=1e-6, data_format="channels_last"):
    if data_format == "channels_last":
        return _layer_norm_channels_last(x, weight, bias, eps)
    elif data_format == "channels_first":
        return _layer_norm_channels_first(x, weight, bias, eps)
    raise NotImplementedError(data_format)


class LayerNorm:
    """Mirror of the PyTorch nn.Module (forward only)."""

    def __init__(self, normalized_shape, eps=1e-6, data_format="channels_last"):
        if data_format not in ("channels_last", "channels_first"):
            raise NotImplementedError
        self.weight = jnp.ones((normalized_shape,), jnp.float32)
        self.bias = jnp.zeros((normalized_shape,), jnp.float32)
        self.eps = eps
        self.data_format = data_format
        self.normalized_shape = (normalized_shape,)

    def __call__(self, x):
        return layer_norm(x, self.weight, self.bias,
                          eps=self.eps, data_format=self.data_format)


# --------------------------------------------------------------------------
# Pure-JAX references (PyTorch semantics)
# --------------------------------------------------------------------------
def _ref_channels_last(x, w, b, eps):
    xf = x.astype(jnp.float32)
    u = xf.mean(-1, keepdims=True)
    s = ((xf - u) ** 2).mean(-1, keepdims=True)
    return ((xf - u) / jnp.sqrt(s + eps) * w + b).astype(x.dtype)


def _ref_channels_first(x, w, b, eps):
    xf = x.astype(jnp.float32)
    u = xf.mean(1, keepdims=True)
    s = ((xf - u) ** 2).mean(1, keepdims=True)
    xn = (xf - u) / jnp.sqrt(s + eps)
    shape = (1, -1) + (1,) * (x.ndim - 2)
    return (xn * w.reshape(shape) + b.reshape(shape)).astype(x.dtype)


if __name__ == "__main__":
    key = jax.random.PRNGKey(0)
    k1, k2, k3, k4, k5, k6, k7 = jax.random.split(key, 7)

    C = 4
    eps = 1e-6
    weight = jax.random.normal(k1, (C,), jnp.float32)
    bias = jax.random.normal(k2, (C,), jnp.float32)

    # --- channels_last: (B, H, W, C) = (2, 16, 16, 4) ---
    x_cl = jax.random.normal(k3, (2, 16, 16, C), jnp.float32)
    mod_cl = LayerNorm(C, eps=eps, data_format="channels_last")
    mod_cl.weight, mod_cl.bias = weight, bias
    out_cl = jax.block_until_ready(mod_cl(x_cl))
    ref_cl = _ref_channels_last(x_cl, weight, bias, eps)
    assert out_cl.shape == x_cl.shape and out_cl.dtype == x_cl.dtype
    assert jnp.allclose(out_cl, ref_cl, atol=1e-5, rtol=1e-5)

    # --- channels_last, non-divisible row count: (3, 10, 20, 4) -> M=600 ---
    x_cl2 = jax.random.normal(k6, (3, 10, 20, C), jnp.float32)
    out_cl2 = jax.block_until_ready(mod_cl(x_cl2))
    ref_cl2 = _ref_channels_last(x_cl2, weight, bias, eps)
    assert out_cl2.shape == x_cl2.shape
    assert jnp.allclose(out_cl2, ref_cl2, atol=1e-5, rtol=1e-5)

    # --- channels_first 4-D: (B, C, H, W) = (2, 4, 16, 16) ---
    x_cf = jax.random.normal(k4, (2, C, 16, 16), jnp.float32)
    mod_cf = LayerNorm(C, eps=eps, data_format="channels_first")
    mod_cf.weight, mod_cf.bias = weight, bias
    out_cf = jax.block_until_ready(mod_cf(x_cf))
    ref_cf = _ref_channels_first(x_cf, weight, bias, eps)
    assert out_cf.shape == x_cf.shape and out_cf.dtype == x_cf.dtype
    assert jnp.allclose(out_cf, ref_cf, atol=1e-5, rtol=1e-5)

    # --- channels_first 4-D with ConvNeXt-like tiny W: (2, 4, 14, 7) ---
    x_cf_small = jax.random.normal(k7, (2, C, 14, 7), jnp.float32)
    out_cf_small = jax.block_until_ready(mod_cf(x_cf_small))
    ref_cf_small = _ref_channels_first(x_cf_small, weight, bias, eps)
    assert out_cf_small.shape == x_cf_small.shape
    assert jnp.allclose(out_cf_small, ref_cf_small, atol=1e-5, rtol=1e-5)

    # --- channels_first 5-D: (B, C, D, H, W) = (2, 4, 4, 8, 8) ---
    x_cf5 = jax.random.normal(k5, (2, C, 4, 8, 8), jnp.float32)
    out_cf5 = jax.block_until_ready(mod_cf(x_cf5))
    ref_cf5 = _ref_channels_first(x_cf5, weight, bias, eps)
    assert out_cf5.shape == x_cf5.shape
    assert jnp.allclose(out_cf5, ref_cf5, atol=1e-5, rtol=1e-5)

    print("KERNEL_OK")
</pallas_src>

<mosaic_0001>
module attributes {stable_mosaic.version = 11 : i64} {
  func.func @_ln_channels_last_kernel(%arg0: i32, %arg1: memref<256x4xf32, #tpu.memory_space<vmem>>, %arg2: memref<1x4xf32, #tpu.memory_space<vmem>>, %arg3: memref<1x4xf32, #tpu.memory_space<vmem>>, %arg4: memref<256x4xf32, #tpu.memory_space<vmem>>) attributes {dimension_semantics = [#tpu.dimension_semantics<parallel>], iteration_bounds = array<i64: 2>, scalar_prefetch = 0 : i64, scratch_operands = 0 : i64, tpu.core_type = #tpu.core_type<tc>, window_params = [{transform_indices = @transform_0, window_bounds = array<i64: 256, 4>}, {pipeline_mode = #tpu.pipeline_mode<synchronous>, transform_indices = @transform_1, window_bounds = array<i64: 1, 4>}, {pipeline_mode = #tpu.pipeline_mode<synchronous>, transform_indices = @transform_2, window_bounds = array<i64: 1, 4>}, {transform_indices = @transform_3, window_bounds = array<i64: 256, 4>}]} {
    %c0 = arith.constant 0 : index
    %c0_0 = arith.constant 0 : index
    %0 = vector.load %arg1[%c0, %c0_0] : memref<256x4xf32, #tpu.memory_space<vmem>>, vector<256x4xf32>
    %cst = arith.constant dense<0.000000e+00> : vector<256xf32>
    %1 = vector.multi_reduction <add>, %0, %cst [1] : vector<256x4xf32> to vector<256xf32>
    %2 = vector.shape_cast %1 : vector<256xf32> to vector<256x1xf32>
    %cst_1 = arith.constant 4.000000e+00 : f32
    %3 = vector.broadcast %cst_1 : f32 to vector<256x1xf32>
    %4 = arith.divf %2, %3 : vector<256x1xf32>
    %5 = vector.broadcast %4 : vector<256x1xf32> to vector<256x4xf32>
    %6 = arith.subf %0, %5 : vector<256x4xf32>
    %7 = arith.mulf %6, %6 : vector<256x4xf32>
    %cst_2 = arith.constant dense<0.000000e+00> : vector<256xf32>
    %8 = vector.multi_reduction <add>, %7, %cst_2 [1] : vector<256x4xf32> to vector<256xf32>
    %9 = vector.shape_cast %8 : vector<256xf32> to vector<256x1xf32>
    %cst_3 = arith.constant 4.000000e+00 : f32
    %10 = vector.broadcast %cst_3 : f32 to vector<256x1xf32>
    %11 = arith.divf %9, %10 : vector<256x1xf32>
    %cst_4 = arith.constant 9.99999997E-7 : f32
    %12 = vector.broadcast %cst_4 : f32 to vector<256x1xf32>
    %13 = arith.addf %11, %12 : vector<256x1xf32>
    %14 = math.rsqrt %13 : vector<256x1xf32>
    %c0_5 = arith.constant 0 : index
    %c0_6 = arith.constant 0 : index
    %15 = vector.load %arg2[%c0_5, %c0_6] : memref<1x4xf32, #tpu.memory_space<vmem>>, vector<1x4xf32>
    %c0_7 = arith.constant 0 : index
    %c0_8 = arith.constant 0 : index
    %16 = vector.load %arg3[%c0_7, %c0_8] : memref<1x4xf32, #tpu.memory_space<vmem>>, vector<1x4xf32>
    %17 = vector.broadcast %14 : vector<256x1xf32> to vector<256x4xf32>
    %18 = arith.mulf %6, %17 : vector<256x4xf32>
    %19 = vector.broadcast %15 : vector<1x4xf32> to vector<256x4xf32>
    %20 = arith.mulf %18, %19 : vector<256x4xf32>
    %21 = vector.broadcast %16 : vector<1x4xf32> to vector<256x4xf32>
    %22 = arith.addf %20, %21 : vector<256x4xf32>
    %c0_9 = arith.constant 0 : index
    %c0_10 = arith.constant 0 : index
    %23 = vector.load %arg4[%c0_9, %c0_10] : memref<256x4xf32, #tpu.memory_space<vmem>>, vector<256x4xf32>
    tpu.vector_store %arg4[%c0_9, %c0_10], %22 {strides = array<i32>} : memref<256x4xf32, #tpu.memory_space<vmem>>, vector<256x4xf32>,
    return
  }
  func.func @transform_0(%arg0: i32) -> (i32, i32) {
    %c0_i32 = arith.constant 0 : i32
    %c0_i32_0 = arith.constant 0 : i32
    return %arg0, %c0_i32 : i32, i32
  }
  func.func @transform_1(%arg0: i32) -> (i32, i32) {
    %c0_i32 = arith.constant 0 : i32
    %c0_i32_0 = arith.constant 0 : i32
    %c0_i32_1 = arith.constant 0 : i32
    return %c0_i32, %c0_i32_0 : i32, i32
  }
  func.func @transform_2(%arg0: i32) -> (i32, i32) {
    %c0_i32 = arith.constant 0 : i32
    %c0_i32_0 = arith.constant 0 : i32
    %c0_i32_1 = arith.constant 0 : i32
    return %c0_i32, %c0_i32_0 : i32, i32
  }
  func.func @transform_3(%arg0: i32) -> (i32, i32) {
    %c0_i32 = arith.constant 0 : i32
    %c0_i32_0 = arith.constant 0 : i32
    return %arg0, %c0_i32 : i32, i32
  }
}

</mosaic_0001>

<llo_original>
// kernel: tpu_custom_call.1
$region0: #{tpu_custom_call.1}
  #allocation0 [shape = 'u32[]', space=smem, size = 0x4, offset = 0x4, fixed_abs, tag = 'smem constant byte address 0x4 - core index']
  #allocation1 [shape = 'u32[144,128]{1,0:T(1,128)}', space=vmem, size = 0x12000, scoped, tag = 'internal scratch']
  %s0 = inlined_call_operand.vmem [shape: f32[512,4], index: 0, kind: input, shape index: {}]
  %s1 = inlined_call_operand.vmem [shape: f32[1,4], index: 1, kind: input, shape index: {}]
  %s2 = inlined_call_operand.vmem [shape: f32[1,4], index: 2, kind: input, shape index: {}]
  %s3 = inlined_call_operand.vmem [shape: f32[512,4], index: 3, kind: output, shape index: {}]
  %s4 = sld [smem:[#allocation0]]
  $region45: #{tpu_custom_call.1} parent=0
    _
  %s6 = ssub.s32 1, %s4
  %s7 = scalar_select 0, %s6, %s4
  loop: start=0, step=1, limit=4
  $region2: #{tpu_custom_call.1} parent=0 // loop_pre_header
    _
  $region3: #{tpu_custom_call.1} parent=0 // loop_header
    %s9 = sphi 0, %s13
    %p10 = scmp.ge.s32.totalorder %s9, 4
    %s19 = sphi 0, %s21
    %s22 = sphi 0, %s19
    %s23 = sphi 0, %s22
    %s39 = sphi 0, %s23
    %s43 = sphi 0, %s43
    %s45 = sphi 0, %s43
    %s46 = sphi 0, %s45
    %s60 = sphi 0, %s46
    %s64 = sphi 0, %s64
    %s66 = sphi 0, %s64
    %s67 = sphi 0, %s66
    %s81 = sphi 0, %s67
    %s87 = sphi 0, %s89
    %s90 = sphi 0, %s87
    %s91 = sphi 0, %s90
    %s107 = sphi 0, %s91
  $region4: #{tpu_custom_call.1} parent=0 // loop_header_branch
    %12 = sbr.rel (%p10) target = $region8
  $region5: #{tpu_custom_call.1} parent=0 // loop_body
    %s14 = ssub.s32 %s9, 1
    %s15 = ssub.s32 %s9, 2
    %s16 = sadd.s32 %s9, 1
    %s17 = ssub.s32 %s9, %s16
    %p18 = scmp.eq.s32.totalorder %s17, 0
    %s20 = sadd.s32 %s19, 1
    %s21 = scalar_select %p18, %s19, %s20
    %p24 = pneg %p18
    %p25 = scmp.eq.s32.totalorder %s9, 1
    %p26 = por %p24, %p25
    %p27 = scmp.ne.s32.totalorder %s19, %s22
    %p28 = scmp.eq.s32.totalorder %s9, 0
    %p29 = por %p27, %p28
    %p30 = scmp.ne.s32.totalorder %s19, %s22
    %p31 = scmp.eq.s32.totalorder %s14, 1
    %p32 = por %p30, %p31
    %p33 = scmp.ne.s32.totalorder %s22, %s23
    %p34 = scmp.eq.s32.totalorder %s14, 0
    %p35 = por %p33, %p34
    %p36 = scmp.ne.s32.totalorder %s22, %s23
    %p37 = scmp.eq.s32.totalorder %s15, 1
    %p38 = por %p36, %p37
    %p40 = scmp.ne.s32.totalorder %s23, %s39
    %p41 = scmp.eq.s32.totalorder %s15, 0
    %p42 = por %p40, %p41
    %s44 = sadd.s32 %s43, 1
    %p47 = scmp.eq.s32.totalorder %s9, 1
    %p48 = scmp.ne.s32.totalorder %s43, %s45
    %p49 = scmp.eq.s32.totalorder %s9, 0
    %p50 = por %p48, %p49
    %p51 = scmp.ne.s32.totalorder %s43, %s45
    %p52 = scmp.eq.s32.totalorder %s14, 1
    %p53 = por %p51, %p52
    %p54 = scmp.ne.s32.totalorder %s45, %s46
    %p55 = scmp.eq.s32.totalorder %s14, 0
    %p56 = por %p54, %p55
    %p57 = scmp.ne.s32.totalorder %s45, %s46
    %p58 = scmp.eq.s32.totalorder %s15, 1
    %p59 = por %p57, %p58
    %p61 = scmp.ne.s32.totalorder %s46, %s60
    %p62 = scmp.eq.s32.totalorder %s15, 0
    %p63 = por %p61, %p62
    %s65 = sadd.s32 %s64, 1
    %p68 = scmp.eq.s32.totalorder %s9, 1
    %p69 = scmp.ne.s32.totalorder %s64, %s66
    %p70 = scmp.eq.s32.totalorder %s9, 0
    %p71 = por %p69, %p70
    %p72 = scmp.ne.s32.totalorder %s64, %s66
    %p73 = scmp.eq.s32.totalorder %s14, 1
    %p74 = por %p72, %p73
    %p75 = scmp.ne.s32.totalorder %s66, %s67
    %p76 = scmp.eq.s32.totalorder %s14, 0
    %p77 = por %p75, %p76
    %p78 = scmp.ne.s32.totalorder %s66, %s67
    %p79 = scmp.eq.s32.totalorder %s15, 1
    %p80 = por %p78, %p79
    %p82 = scmp.ne.s32.totalorder %s67, %s81
    %p83 = scmp.eq.s32.totalorder %s15, 0
    %p84 = por %p82, %p83
    %s85 = ssub.s32 %s9, %s16
    %p86 = scmp.eq.s32.totalorder %s85, 0
    %s88 = sadd.s32 %s87, 1
    %s89 = scalar_select %p86, %s87, %s88
    %p92 = pneg %p86
    %p93 = scmp.eq.s32.totalorder %s9, 1
    %p94 = por %p92, %p93
    %p95 = scmp.ne.s32.totalorder %s87, %s90
    %p96 = scmp.eq.s32.totalorder %s9, 0
    %p97 = por %p95, %p96
    %p98 = scmp.ne.s32.totalorder %s87, %s90
    %p99 = scmp.eq.s32.totalorder %s14, 1
    %p100 = por %p98, %p99
    %p101 = scmp.ne.s32.totalorder %s90, %s91
    %p102 = scmp.eq.s32.totalorder %s14, 0
    %p103 = por %p101, %p102
    %p104 = scmp.ne.s32.totalorder %s90, %s91
    %p105 = scmp.eq.s32.totalorder %s15, 1
    %p106 = por %p104, %p105
    %p108 = scmp.ne.s32.totalorder %s91, %s107
    %p109 = scmp.eq.s32.totalorder %s15, 0
    %p110 = por %p108, %p109
    %p111 = scmp.le.s32.totalorder 1, %s9
    %p112 = scmp.lt.s32.totalorder %s9, 3
    %p113 = pnand %p111, %p112
    %p114 = pneg %p113
    // Predicated region
    $region9: #{tpu_custom_call.1} parent=5 // pred_check
      _
    $region10: #{tpu_custom_call.1} parent=5 // pred_check_branch
      %116 = sbr.rel (%p113) target = $region12
    $region11: #{tpu_custom_call.1} parent=5 // pred_region
      %s117 = ssub.s32 %s9, 1
      // Predicated region
      $region13: #{tpu_custom_call.1} parent=11 // pred_check
        %p118 = pneg %p56
      $region14: #{tpu_custom_call.1} parent=11 // pred_check_branch
        %120 = sbr.rel (%p118) target = $region16
      $region15: #{tpu_custom_call.1} parent=11 // pred_region
        _
      $region16: #{tpu_custom_call.1} parent=11 // pred_fallthru
        _
      // Predicated region
      $region17: #{tpu_custom_call.1} parent=11 // pred_check
        %p121 = pneg %p77
      $region18: #{tpu_custom_call.1} parent=11 // pred_check_branch
        %123 = sbr.rel (%p121) target = $region20
      $region19: #{tpu_custom_call.1} parent=11 // pred_region
        _
      $region20: #{tpu_custom_call.1} parent=11 // pred_fallthru
        _
    $region12: #{tpu_custom_call.1} parent=5 // pred_fallthru
      _
    %p124 = scmp.lt.s32.totalorder %s9, 2
    // Predicated region
    $region21: #{tpu_custom_call.1} parent=5 // pred_check
      %p125 = pneg %p124
    $region22: #{tpu_custom_call.1} parent=5 // pred_check_branch
      %127 = sbr.rel (%p125) target = $region24
    $region23: #{tpu_custom_call.1} parent=5 // pred_region
      // Predicated region
      $region25: #{tpu_custom_call.1} parent=23 // pred_check
        %p128 = pneg %p29
      $region26: #{tpu_custom_call.1} parent=23 // pred_check_branch
        %130 = sbr.rel (%p128) target = $region28
      $region27: #{tpu_custom_call.1} parent=23 // pred_region
        %s131 = smul.u32 32, %s9
        %p132 = scmp.lt.s32.totalorder %s131, 63
        %s133 = scalar_select %p132, %s131, 63
        %s134 = smul.addr %s133, 8
        %s135 = scalar_lea.vmem %s0, %s134
        %s136 = smul.u32 32, %s9
      $region28: #{tpu_custom_call.1} parent=23 // pred_fallthru
        _
    $region24: #{tpu_custom_call.1} parent=5 // pred_fallthru
      _
    %p137 = scmp.le.s32.totalorder 1, %s9
    %p138 = scmp.lt.s32.totalorder %s9, 3
    %p139 = pnand %p137, %p138
    %p140 = pneg %p139
    // Predicated region
    $region29: #{tpu_custom_call.1} parent=5 // pred_check
      _
    $region30: #{tpu_custom_call.1} parent=5 // pred_check_branch
      %142 = sbr.rel (%p139) target = $region32
    $region31: #{tpu_custom_call.1} parent=5 // pred_region
      %s143 = ssub.s32 %s9, 1
      %s144 = smul.u32 32, %s14
      %p145 = scmp.lt.s32.totalorder %s144, 63
      %s146 = scalar_select %p145, %s144, 63
      %s147 = smul.addr %s146, 8
      %s148 = scalar_lea.vmem %s0, %s147
      %p149 = pneg %p35
      %p150 = pneg %p32
      %p151 = pneg %p56
      %p152 = pneg %p53
      %p153 = pneg %p77
      %p154 = pneg %p74
      %p155 = pneg %p103
      %p156 = pneg %p100
      %s157 = smul.u32 32, %s14
      %p158 = scmp.lt.s32.totalorder %s157, 63
      %s159 = scalar_select %p158, %s157, 63
      %s160 = smul.addr %s159, 8
      %s161 = scalar_lea.vmem %s3, %s160
      %s162 = smul.u32 32, %s14
      %p163 = scmp.lt.s32.totalorder %s162, 63
      %s164 = scalar_select %p163, %s162, 63
      %s165 = smul.addr %s164, 8
      %s166 = scalar_lea.vmem %s0, %s165
      %s167 = smul.u32 32, %s14
      %s168 = smul.u32 32, %s14
      %p169 = scmp.lt.s32.totalorder %s168, 63
      %s170 = scalar_select %p169, %s168, 63
      %s171 = smul.addr %s170, 8
      %s172 = scalar_lea.vmem %s3, %s171
      %s173 = smul.u32 32, %s14
      %v174 = vld [vmem:[%s166] sm:$0xff]
      %v175 = vld [vmem:[%s166 + $0x8] sm:$0xff]
      %v176 = vld [vmem:[%s166 + $0x10] sm:$0xff]
      %v177 = vld [vmem:[%s166 + $0x18] sm:$0xff]
      %v178 = vld [vmem:[%s166 + $0x20] sm:$0xff]
      %v179 = vld [vmem:[%s166 + $0x28] sm:$0xff]
      %v180 = vld [vmem:[%s166 + $0x30] sm:$0xff]
      %v181 = vld [vmem:[%s166 + $0x38] sm:$0xff]
      %v182 = vld [vmem:[%s166 + $0x40] sm:$0xff]
      %v183 = vld [vmem:[%s166 + $0x48] sm:$0xff]
      %v184 = vld [vmem:[%s166 + $0x50] sm:$0xff]
      %v185 = vld [vmem:[%s166 + $0x58] sm:$0xff]
      %v186 = vld [vmem:[%s166 + $0x60] sm:$0xff]
      %v187 = vld [vmem:[%s166 + $0x68] sm:$0xff]
      %v188 = vld [vmem:[%s166 + $0x70] sm:$0xff]
      %v189 = vld [vmem:[%s166 + $0x78] sm:$0xff]
      %v190 = vld [vmem:[%s166 + $0x80] sm:$0xff]
      %v191 = vld [vmem:[%s166 + $0x88] sm:$0xff]
      %v192 = vld [vmem:[%s166 + $0x90] sm:$0xff]
      %v193 = vld [vmem:[%s166 + $0x98] sm:$0xff]
      %v194 = vld [vmem:[%s166 + $0xa0] sm:$0xff]
      %v195 = vld [vmem:[%s166 + $0xa8] sm:$0xff]
      %v196 = vld [vmem:[%s166 + $0xb0] sm:$0xff]
      %v197 = vld [vmem:[%s166 + $0xb8] sm:$0xff]
      %v198 = vld [vmem:[%s166 + $0xc0] sm:$0xff]
      %v199 = vld [vmem:[%s166 + $0xc8] sm:$0xff]
      %v200 = vld [vmem:[%s166 + $0xd0] sm:$0xff]
      %v201 = vld [vmem:[%s166 + $0xd8] sm:$0xff]
      %v202 = vld [vmem:[%s166 + $0xe0] sm:$0xff]
      %v203 = vld [vmem:[%s166 + $0xe8] sm:$0xff]
      %v204 = vld [vmem:[%s166 + $0xf0] sm:$0xff]
      %v205 = vld [vmem:[%s166 + $0xf8] sm:$0xff]
      %vm206 = vcmask 31744
      %v207 = vsel %vm206, %v174, 0.0
      %208 = vadd.xlane.f32.xlu0 %v207
      %v209 = vpop.xlane.xlu0 %208
      %v210 = vsel %vm206, %v175, 0.0
      %211 = vadd.xlane.f32.xlu0 %v210
      %v212 = vpop.xlane.xlu0 %211
      %v213 = vsel %vm206, %v176, 0.0
      %214 = vadd.xlane.f32.xlu0 %v213
      %v215 = vpop.xlane.xlu0 %214
      %v216 = vsel %vm206, %v177, 0.0
      %217 = vadd.xlane.f32.xlu0 %v216
      %v218 = vpop.xlane.xlu0 %217
      %v219 = vsel %vm206, %v178, 0.0
      %220 = vadd.xlane.f32.xlu0 %v219
      %v221 = vpop.xlane.xlu0 %220
      %v222 = vsel %vm206, %v179, 0.0
      %223 = vadd.xlane.f32.xlu0 %v222
      %v224 = vpop.xlane.xlu0 %223
      %v225 = vsel %vm206, %v180, 0.0
      %226 = vadd.xlane.f32.xlu0 %v225
      %v227 = vpop.xlane.xlu0 %226
      %v228 = vsel %vm206, %v181, 0.0
      %229 = vadd.xlane.f32.xlu0 %v228
      %v230 = vpop.xlane.xlu0 %229
      %v231 = vsel %vm206, %v182, 0.0
      %232 = vadd.xlane.f32.xlu0 %v231
      %v233 = vpop.xlane.xlu0 %232
      %v234 = vsel %vm206, %v183, 0.0
      %235 = vadd.xlane.f32.xlu0 %v234
      %v236 = vpop.xlane.xlu0 %235
      %v237 = vsel %vm206, %v184, 0.0
      %238 = vadd.xlane.f32.xlu0 %v237
      %v239 = vpop.xlane.xlu0 %238
      %v240 = vsel %vm206, %v185, 0.0
      %241 = vadd.xlane.f32.xlu0 %v240
      %v242 = vpop.xlane.xlu0 %241
      %v243 = vsel %vm206, %v186, 0.0
      %244 = vadd.xlane.f32.xlu0 %v243
      %v245 = vpop.xlane.xlu0 %244
      %v246 = vsel %vm206, %v187, 0.0
      %247 = vadd.xlane.f32.xlu0 %v246
      %v248 = vpop.xlane.xlu0 %247
      %v249 = vsel %vm206, %v188, 0.0
      %250 = vadd.xlane.f32.xlu0 %v249
      %v251 = vpop.xlane.xlu0 %250
      %v252 = vsel %vm206, %v189, 0.0
      %253 = vadd.xlane.f32.xlu0 %v252
      %v254 = vpop.xlane.xlu0 %253
      %v255 = vsel %vm206, %v190, 0.0
      %256 = vadd.xlane.f32.xlu0 %v255
      %v257 = vpop.xlane.xlu0 %256
      %v258 = vsel %vm206, %v191, 0.0
      %259 = vadd.xlane.f32.xlu0 %v258
      %v260 = vpop.xlane.xlu0 %259
      %v261 = vsel %vm206, %v192, 0.0
      %262 = vadd.xlane.f32.xlu0 %v261
      %v263 = vpop.xlane.xlu0 %262
      %v264 = vsel %vm206, %v193, 0.0
      %265 = vadd.xlane.f32.xlu0 %v264
      %v266 = vpop.xlane.xlu0 %265
      %v267 = vsel %vm206, %v194, 0.0
      %268 = vadd.xlane.f32.xlu0 %v267
      %v269 = vpop.xlane.xlu0 %268
      %v270 = vsel %vm206, %v195, 0.0
      %271 = vadd.xlane.f32.xlu0 %v270
      %v272 = vpop.xlane.xlu0 %271
      %v273 = vsel %vm206, %v196, 0.0
      %274 = vadd.xlane.f32.xlu0 %v273
      %v275 = vpop.xlane.xlu0 %274
      %v276 = vsel %vm206, %v197, 0.0
      %277 = vadd.xlane.f32.xlu0 %v276
      %v278 = vpop.xlane.xlu0 %277
      %v279 = vsel %vm206, %v198, 0.0
      %280 = vadd.xlane.f32.xlu0 %v279
      %v281 = vpop.xlane.xlu0 %280
      %v282 = vsel %vm206, %v199, 0.0
      %283 = vadd.xlane.f32.xlu0 %v282
      %v284 = vpop.xlane.xlu0 %283
      %v285 = vsel %vm206, %v200, 0.0
      %286 = vadd.xlane.f32.xlu0 %v285
      %v287 = vpop.xlane.xlu0 %286
      %v288 = vsel %vm206, %v201, 0.0
      %289 = vadd.xlane.f32.xlu0 %v288
      %v290 = vpop.xlane.xlu0 %289
      %v291 = vsel %vm206, %v202, 0.0
      %292 = vadd.xlane.f32.xlu0 %v291
      %v293 = vpop.xlane.xlu0 %292
      %v294 = vsel %vm206, %v203, 0.0
      %295 = vadd.xlane.f32.xlu0 %v294
      %v296 = vpop.xlane.xlu0 %295
      %v297 = vsel %vm206, %v204, 0.0
      %298 = vadd.xlane.f32.xlu0 %v297
      %v299 = vpop.xlane.xlu0 %298
      %v300 = vsel %vm206, %v205, 0.0
      %301 = vadd.xlane.f32.xlu0 %v300
      %v302 = vpop.xlane.xlu0 %301
      %v303 = vrcp.pop 4.0
      %v304 = vmul.f32 %v209, %v303
      %v305 = vmul.f32 %v212, %v303
      %v306 = vmul.f32 %v215, %v303
      %v307 = vmul.f32 %v218, %v303
      %v308 = vmul.f32 %v221, %v303
      %v309 = vmul.f32 %v224, %v303
      %v310 = vmul.f32 %v227, %v303
      %v311 = vmul.f32 %v230, %v303
      %v312 = vmul.f32 %v233, %v303
      %v313 = vmul.f32 %v236, %v303
      %v314 = vmul.f32 %v239, %v303
      %v315 = vmul.f32 %v242, %v303
      %v316 = vmul.f32 %v245, %v303
      %v317 = vmul.f32 %v248, %v303
      %v318 = vmul.f32 %v251, %v303
      %v319 = vmul.f32 %v254, %v303
      %v320 = vmul.f32 %v257, %v303
      %v321 = vmul.f32 %v260, %v303
      %v322 = vmul.f32 %v263, %v303
      %v323 = vmul.f32 %v266, %v303
      %v324 = vmul.f32 %v269, %v303
      %v325 = vmul.f32 %v272, %v303
      %v326 = vmul.f32 %v275, %v303
      %v327 = vmul.f32 %v278, %v303
      %v328 = vmul.f32 %v281, %v303
      %v329 = vmul.f32 %v284, %v303
      %v330 = vmul.f32 %v287, %v303
      %v331 = vmul.f32 %v290, %v303
      %v332 = vmul.f32 %v293, %v303
      %v333 = vmul.f32 %v296, %v303
      %v334 = vmul.f32 %v299, %v303
      %v335 = vmul.f32 %v302, %v303
      %v336 = vsub.f32 %v174, %v304
      %v337 = vsub.f32 %v175, %v305
      %v338 = vsub.f32 %v176, %v306
      %v339 = vsub.f32 %v177, %v307
      %v340 = vsub.f32 %v178, %v308
      %v341 = vsub.f32 %v179, %v309
      %v342 = vsub.f32 %v180, %v310
      %v343 = vsub.f32 %v181, %v311
      %v344 = vsub.f32 %v182, %v312
      %v345 = vsub.f32 %v183, %v313
      %v346 = vsub.f32 %v184, %v314
      %v347 = vsub.f32 %v185, %v315
      %v348 = vsub.f32 %v186, %v316
      %v349 = vsub.f32 %v187, %v317
      %v350 = vsub.f32 %v188, %v318
      %v351 = vsub.f32 %v189, %v319
      %v352 = vsub.f32 %v190, %v320
      %v353 = vsub.f32 %v191, %v321
      %v354 = vsub.f32 %v192, %v322
      %v355 = vsub.f32 %v193, %v323
      %v356 = vsub.f32 %v194, %v324
      %v357 = vsub.f32 %v195, %v325
      %v358 = vsub.f32 %v196, %v326
      %v359 = vsub.f32 %v197, %v327
      %v360 = vsub.f32 %v198, %v328
      %v361 = vsub.f32 %v199, %v329
      %v362 = vsub.f32 %v200, %v330
      %v363 = vsub.f32 %v201, %v331
      %v364 = vsub.f32 %v202, %v332
      %v365 = vsub.f32 %v203, %v333
      %v366 = vsub.f32 %v204, %v334
      %v367 = vsub.f32 %v205, %v335
      %v368 = vmul.f32 %v336, %v336
      %v369 = vmul.f32 %v337, %v337
      %v370 = vmul.f32 %v338, %v338
      %v371 = vmul.f32 %v339, %v339
      %v372 = vmul.f32 %v340, %v340
      %v373 = vmul.f32 %v341, %v341
      %v374 = vmul.f32 %v342, %v342
      %v375 = vmul.f32 %v343, %v343
      %v376 = vmul.f32 %v344, %v344
      %v377 = vmul.f32 %v345, %v345
      %v378 = vmul.f32 %v346, %v346
      %v379 = vmul.f32 %v347, %v347
      %v380 = vmul.f32 %v348, %v348
      %v381 = vmul.f32 %v349, %v349
      %v382 = vmul.f32 %v350, %v350
      %v383 = vmul.f32 %v351, %v351
      %v384 = vmul.f32 %v352, %v352
      %v385 = vmul.f32 %v353, %v353
      %v386 = vmul.f32 %v354, %v354
      %v387 = vmul.f32 %v355, %v355
      %v388 = vmul.f32 %v356, %v356
      %v389 = vmul.f32 %v357, %v357
      %v390 = vmul.f32 %v358, %v358
      %v391 = vmul.f32 %v359, %v359
      %v392 = vmul.f32 %v360, %v360
      %v393 = vmul.f32 %v361, %v361
      %v394 = vmul.f32 %v362, %v362
      %v395 = vmul.f32 %v363, %v363
      %v396 = vmul.f32 %v364, %v364
      %v397 = vmul.f32 %v365, %v365
      %v398 = vmul.f32 %v366, %v366
      %v399 = vmul.f32 %v367, %v367
      %v400 = vsel %vm206, %v368, 0.0
      %401 = vadd.xlane.f32.xlu0 %v400
      %v402 = vpop.xlane.xlu0 %401
      %v403 = vsel %vm206, %v369, 0.0
      %404 = vadd.xlane.f32.xlu0 %v403
      %v405 = vpop.xlane.xlu0 %404
      %v406 = vsel %vm206, %v370, 0.0
      %407 = vadd.xlane.f32.xlu0 %v406
      %v408 = vpop.xlane.xlu0 %407
      %v409 = vsel %vm206, %v371, 0.0
      %410 = vadd.xlane.f32.xlu0 %v409
      %v411 = vpop.xlane.xlu0 %410
      %v412 = vsel %vm206, %v372, 0.0
      %413 = vadd.xlane.f32.xlu0 %v412
      %v414 = vpop.xlane.xlu0 %413
      %v415 = vsel %vm206, %v373, 0.0
      %416 = vadd.xlane.f32.xlu0 %v415
      %v417 = vpop.xlane.xlu0 %416
      %v418 = vsel %vm206, %v374, 0.0
      %419 = vadd.xlane.f32.xlu0 %v418
      %v420 = vpop.xlane.xlu0 %419
      %v421 = vsel %vm206, %v375, 0.0
      %422 = vadd.xlane.f32.xlu0 %v421
      %v423 = vpop.xlane.xlu0 %422
      %v424 = vsel %vm206, %v376, 0.0
      %425 = vadd.xlane.f32.xlu0 %v424
      %v426 = vpop.xlane.xlu0 %425
      %v427 = vsel %vm206, %v377, 0.0
      %428 = vadd.xlane.f32.xlu0 %v427
      %v429 = vpop.xlane.xlu0 %428
      %v430 = vsel %vm206, %v378, 0.0
      %431 = vadd.xlane.f32.xlu0 %v430
      %v432 = vpop.xlane.xlu0 %431
      %v433 = vsel %vm206, %v379, 0.0
      %434 = vadd.xlane.f32.xlu0 %v433
      %v435 = vpop.xlane.xlu0 %434
      %v436 = vsel %vm206, %v380, 0.0
      %437 = vadd.xlane.f32.xlu0 %v436
      %v438 = vpop.xlane.xlu0 %437
      %v439 = vsel %vm206, %v381, 0.0
      %440 = vadd.xlane.f32.xlu0 %v439
      %v441 = vpop.xlane.xlu0 %440
      %v442 = vsel %vm206, %v382, 0.0
      %443 = vadd.xlane.f32.xlu0 %v442
      %v444 = vpop.xlane.xlu0 %443
      %v445 = vsel %vm206, %v383, 0.0
      %446 = vadd.xlane.f32.xlu0 %v445
      %v447 = vpop.xlane.xlu0 %446
      %v448 = vsel %vm206, %v384, 0.0
      %449 = vadd.xlane.f32.xlu0 %v448
      %v450 = vpop.xlane.xlu0 %449
      %v451 = vsel %vm206, %v385, 0.0
      %452 = vadd.xlane.f32.xlu0 %v451
      %v453 = vpop.xlane.xlu0 %452
      %v454 = vsel %vm206, %v386, 0.0
      %455 = vadd.xlane.f32.xlu0 %v454
      %v456 = vpop.xlane.xlu0 %455
      %v457 = vsel %vm206, %v387, 0.0
      %458 = vadd.xlane.f32.xlu0 %v457
      %v459 = vpop.xlane.xlu0 %458
      %v460 = vsel %vm206, %v388, 0.0
      %461 = vadd.xlane.f32.xlu0 %v460
      %v462 = vpop.xlane.xlu0 %461
      %v463 = vsel %vm206, %v389, 0.0
      %464 = vadd.xlane.f32.xlu0 %v463
      %v465 = vpop.xlane.xlu0 %464
      %v466 = vsel %vm206, %v390, 0.0
      %467 = vadd.xlane.f32.xlu0 %v466
      %v468 = vpop.xlane.xlu0 %467
      %v469 = vsel %vm206, %v391, 0.0
      %470 = vadd.xlane.f32.xlu0 %v469
      %v471 = vpop.xlane.xlu0 %470
      %v472 = vsel %vm206, %v392, 0.0
      %473 = vadd.xlane.f32.xlu0 %v472
      %v474 = vpop.xlane.xlu0 %473
      %v475 = vsel %vm206, %v393, 0.0
      %476 = vadd.xlane.f32.xlu0 %v475
      %v477 = vpop.xlane.xlu0 %476
      %v478 = vsel %vm206, %v394, 0.0
      %479 = vadd.xlane.f32.xlu0 %v478
      %v480 = vpop.xlane.xlu0 %479
      %v481 = vsel %vm206, %v395, 0.0
      %482 = vadd.xlane.f32.xlu0 %v481
      %v483 = vpop.xlane.xlu0 %482
      %v484 = vsel %vm206, %v396, 0.0
      %485 = vadd.xlane.f32.xlu0 %v484
      %v486 = vpop.xlane.xlu0 %485
      %v487 = vsel %vm206, %v397, 0.0
      %488 = vadd.xlane.f32.xlu0 %v487
      %v489 = vpop.xlane.xlu0 %488
      %v490 = vsel %vm206, %v398, 0.0
      %491 = vadd.xlane.f32.xlu0 %v490
      %v492 = vpop.xlane.xlu0 %491
      %v493 = vsel %vm206, %v399, 0.0
      %494 = vadd.xlane.f32.xlu0 %v493
      %v495 = vpop.xlane.xlu0 %494
      %v496 = vmul.f32 %v402, %v303
      %v497 = vmul.f32 %v405, %v303
      %v498 = vmul.f32 %v408, %v303
      %v499 = vmul.f32 %v411, %v303
      %v500 = vmul.f32 %v414, %v303
      %v501 = vmul.f32 %v417, %v303
      %v502 = vmul.f32 %v420, %v303
      %v503 = vmul.f32 %v423, %v303
      %v504 = vmul.f32 %v426, %v303
      %v505 = vmul.f32 %v429, %v303
      %v506 = vmul.f32 %v432, %v303
      %v507 = vmul.f32 %v435, %v303
      %v508 = vmul.f32 %v438, %v303
      %v509 = vmul.f32 %v441, %v303
      %v510 = vmul.f32 %v444, %v303
      %v511 = vmul.f32 %v447, %v303
      %v512 = vmul.f32 %v450, %v303
      %v513 = vmul.f32 %v453, %v303
      %v514 = vmul.f32 %v456, %v303
      %v515 = vmul.f32 %v459, %v303
      %v516 = vmul.f32 %v462, %v303
      %v517 = vmul.f32 %v465, %v303
      %v518 = vmul.f32 %v468, %v303
      %v519 = vmul.f32 %v471, %v303
      %v520 = vmul.f32 %v474, %v303
      %v521 = vmul.f32 %v477, %v303
      %v522 = vmul.f32 %v480, %v303
      %v523 = vmul.f32 %v483, %v303
      %v524 = vmul.f32 %v486, %v303
      %v525 = vmul.f32 %v489, %v303
      %v526 = vmul.f32 %v492, %v303
      %v527 = vmul.f32 %v495, %v303
      %v528 = vadd.f32 %v496, 1e-06
      %v529 = vadd.f32 %v497, 1e-06
      %v530 = vadd.f32 %v498, 1e-06
      %v531 = vadd.f32 %v499, 1e-06
      %v532 = vadd.f32 %v500, 1e-06
      %v533 = vadd.f32 %v501, 1e-06
      %v534 = vadd.f32 %v502, 1e-06
      %v535 = vadd.f32 %v503, 1e-06
      %v536 = vadd.f32 %v504, 1e-06
      %v537 = vadd.f32 %v505, 1e-06
      %v538 = vadd.f32 %v506, 1e-06
      %v539 = vadd.f32 %v507, 1e-06
      %v540 = vadd.f32 %v508, 1e-06
      %v541 = vadd.f32 %v509, 1e-06
      %v542 = vadd.f32 %v510, 1e-06
      %v543 = vadd.f32 %v511, 1e-06
      %v544 = vadd.f32 %v512, 1e-06
      %v545 = vadd.f32 %v513, 1e-06
      %v546 = vadd.f32 %v514, 1e-06
      %v547 = vadd.f32 %v515, 1e-06
      %v548 = vadd.f32 %v516, 1e-06
      %v549 = vadd.f32 %v517, 1e-06
      %v550 = vadd.f32 %v518, 1e-06
      %v551 = vadd.f32 %v519, 1e-06
      %v552 = vadd.f32 %v520, 1e-06
      %v553 = vadd.f32 %v521, 1e-06
      %v554 = vadd.f32 %v522, 1e-06
      %v555 = vadd.f32 %v523, 1e-06
      %v556 = vadd.f32 %v524, 1e-06
      %v557 = vadd.f32 %v525, 1e-06
      %v558 = vadd.f32 %v526, 1e-06
      %v559 = vadd.f32 %v527, 1e-06
      %v560 = vrsqrt.pop %v528
      %v561 = vrsqrt.pop %v529
      %v562 = vrsqrt.pop %v530
      %v563 = vrsqrt.pop %v531
      %v564 = vrsqrt.pop %v532
      %v565 = vrsqrt.pop %v533
      %v566 = vrsqrt.pop %v534
      %v567 = vrsqrt.pop %v535
      %v568 = vrsqrt.pop %v536
      %v569 = vrsqrt.pop %v537
      %v570 = vrsqrt.pop %v538
      %v571 = vrsqrt.pop %v539
      %v572 = vrsqrt.pop %v540
      %v573 = vrsqrt.pop %v541
      %v574 = vrsqrt.pop %v542
      %v575 = vrsqrt.pop %v543
      %v576 = vrsqrt.pop %v544
      %v577 = vrsqrt.pop %v545
      %v578 = vrsqrt.pop %v546
      %v579 = vrsqrt.pop %v547
      %v580 = vrsqrt.pop %v548
      %v581 = vrsqrt.pop %v549
      %v582 = vrsqrt.pop %v550
      %v583 = vrsqrt.pop %v551
      %v584 = vrsqrt.pop %v552
      %v585 = vrsqrt.pop %v553
      %v586 = vrsqrt.pop %v554
      %v587 = vrsqrt.pop %v555
      %v588 = vrsqrt.pop %v556
      %v589 = vrsqrt.pop %v557
      %v590 = vrsqrt.pop %v558
      %v591 = vrsqrt.pop %v559
      %v592 = vld [vmem:[%s1] sm:$0x1]
      %v593 = vld [vmem:[%s2] sm:$0x1]
      %v594 = vmul.f32 %v336, %v560
      %v595 = vmul.f32 %v337, %v561
      %v596 = vmul.f32 %v338, %v562
      %v597 = vmul.f32 %v339, %v563
      %v598 = vmul.f32 %v340, %v564
      %v599 = vmul.f32 %v341, %v565
      %v600 = vmul.f32 %v342, %v566
      %v601 = vmul.f32 %v343, %v567
      %v602 = vmul.f32 %v344, %v568
      %v603 = vmul.f32 %v345, %v569
      %v604 = vmul.f32 %v346, %v570
      %v605 = vmul.f32 %v347, %v571
      %v606 = vmul.f32 %v348, %v572
      %v607 = vmul.f32 %v349, %v573
      %v608 = vmul.f32 %v350, %v574
      %v609 = vmul.f32 %v351, %v575
      %v610 = vmul.f32 %v352, %v576
      %v611 = vmul.f32 %v353, %v577
      %v612 = vmul.f32 %v354, %v578
      %v613 = vmul.f32 %v355, %v579
      %v614 = vmul.f32 %v356, %v580
      %v615 = vmul.f32 %v357, %v581
      %v616 = vmul.f32 %v358, %v582
      %v617 = vmul.f32 %v359, %v583
      %v618 = vmul.f32 %v360, %v584
      %v619 = vmul.f32 %v361, %v585
      %v620 = vmul.f32 %v362, %v586
      %v621 = vmul.f32 %v363, %v587
      %v622 = vmul.f32 %v364, %v588
      %v623 = vmul.f32 %v365, %v589
      %v624 = vmul.f32 %v366, %v590
      %v625 = vmul.f32 %v367, %v591
      %v627 = vlaneseq
      %v628 = vshrl.u32 %v627, 7
      %v629 = vsub.s32 0, %v628
      %v630 = vrot.slane %v592, %v629
      %v632 = vmul.f32 %v594, %v630
      %v633 = vmul.f32 %v595, %v630
      %v634 = vmul.f32 %v596, %v630
      %v635 = vmul.f32 %v597, %v630
      %v636 = vmul.f32 %v598, %v630
      %v637 = vmul.f32 %v599, %v630
      %v638 = vmul.f32 %v600, %v630
      %v639 = vmul.f32 %v601, %v630
      %v640 = vmul.f32 %v602, %v630
      %v641 = vmul.f32 %v603, %v630
      %v642 = vmul.f32 %v604, %v630
      %v643 = vmul.f32 %v605, %v630
      %v644 = vmul.f32 %v606, %v630
      %v645 = vmul.f32 %v607, %v630
      %v646 = vmul.f32 %v608, %v630
      %v647 = vmul.f32 %v609, %v630
      %v648 = vmul.f32 %v610, %v630
      %v649 = vmul.f32 %v611, %v630
      %v650 = vmul.f32 %v612, %v630
      %v651 = vmul.f32 %v613, %v630
      %v652 = vmul.f32 %v614, %v630
      %v653 = vmul.f32 %v615, %v630
      %v654 = vmul.f32 %v616, %v630
      %v655 = vmul.f32 %v617, %v630
      %v656 = vmul.f32 %v618, %v630
      %v657 = vmul.f32 %v619, %v630
      %v658 = vmul.f32 %v620, %v630
      %v659 = vmul.f32 %v621, %v630
      %v660 = vmul.f32 %v622, %v630
      %v661 = vmul.f32 %v623, %v630
      %v662 = vmul.f32 %v624, %v630
      %v663 = vmul.f32 %v625, %v630
      %v665 = vlaneseq
      %v666 = vshrl.u32 %v665, 7
      %v667 = vsub.s32 0, %v666
      %v668 = vrot.slane %v593, %v667
      %v670 = vadd.f32 %v632, %v668
      %v671 = vadd.f32 %v633, %v668
      %v672 = vadd.f32 %v634, %v668
      %v673 = vadd.f32 %v635, %v668
      %v674 = vadd.f32 %v636, %v668
      %v675 = vadd.f32 %v637, %v668
      %v676 = vadd.f32 %v638, %v668
      %v677 = vadd.f32 %v639, %v668
      %v678 = vadd.f32 %v640, %v668
      %v679 = vadd.f32 %v641, %v668
      %v680 = vadd.f32 %v642, %v668
      %v681 = vadd.f32 %v643, %v668
      %v682 = vadd.f32 %v644, %v668
      %v683 = vadd.f32 %v645, %v668
      %v684 = vadd.f32 %v646, %v668
      %v685 = vadd.f32 %v647, %v668
      %v686 = vadd.f32 %v648, %v668
      %v687 = vadd.f32 %v649, %v668
      %v688 = vadd.f32 %v650, %v668
      %v689 = vadd.f32 %v651, %v668
      %v690 = vadd.f32 %v652, %v668
      %v691 = vadd.f32 %v653, %v668
      %v692 = vadd.f32 %v654, %v668
      %v693 = vadd.f32 %v655, %v668
      %v694 = vadd.f32 %v656, %v668
      %v695 = vadd.f32 %v657, %v668
      %v696 = vadd.f32 %v658, %v668
      %v697 = vadd.f32 %v659, %v668
      %v698 = vadd.f32 %v660, %v668
      %v699 = vadd.f32 %v661, %v668
      %v700 = vadd.f32 %v662, %v668
      %v701 = vadd.f32 %v663, %v668
      %702 = vst.msk [vmem:[%s172] sm:$0xff] %vm206, %v670
      %703 = vst.msk [vmem:[%s172 + $0x8] sm:$0xff] %vm206, %v671
      %704 = vst.msk [vmem:[%s172 + $0x10] sm:$0xff] %vm206, %v672
      %705 = vst.msk [vmem:[%s172 + $0x18] sm:$0xff] %vm206, %v673
      %706 = vst.msk [vmem:[%s172 + $0x20] sm:$0xff] %vm206, %v674
      %707 = vst.msk [vmem:[%s172 + $0x28] sm:$0xff] %vm206, %v675
      %708 = vst.msk [vmem:[%s172 + $0x30] sm:$0xff] %vm206, %v676
      %709 = vst.msk [vmem:[%s172 + $0x38] sm:$0xff] %vm206, %v677
      %710 = vst.msk [vmem:[%s172 + $0x40] sm:$0xff] %vm206, %v678
      %711 = vst.msk [vmem:[%s172 + $0x48] sm:$0xff] %vm206, %v679
      %712 = vst.msk [vmem:[%s172 + $0x50] sm:$0xff] %vm206, %v680
      %713 = vst.msk [vmem:[%s172 + $0x58] sm:$0xff] %vm206, %v681
      %714 = vst.msk [vmem:[%s172 + $0x60] sm:$0xff] %vm206, %v682
      %715 = vst.msk [vmem:[%s172 + $0x68] sm:$0xff] %vm206, %v683
      %716 = vst.msk [vmem:[%s172 + $0x70] sm:$0xff] %vm206, %v684
      %717 = vst.msk [vmem:[%s172 + $0x78] sm:$0xff] %vm206, %v685
      %718 = vst.msk [vmem:[%s172 + $0x80] sm:$0xff] %vm206, %v686
      %719 = vst.msk [vmem:[%s172 + $0x88] sm:$0xff] %vm206, %v687
      %720 = vst.msk [vmem:[%s172 + $0x90] sm:$0xff] %vm206, %v688
      %721 = vst.msk [vmem:[%s172 + $0x98] sm:$0xff] %vm206, %v689
      %722 = vst.msk [vmem:[%s172 + $0xa0] sm:$0xff] %vm206, %v690
      %723 = vst.msk [vmem:[%s172 + $0xa8] sm:$0xff] %vm206, %v691
      %724 = vst.msk [vmem:[%s172 + $0xb0] sm:$0xff] %vm206, %v692
      %725 = vst.msk [vmem:[%s172 + $0xb8] sm:$0xff] %vm206, %v693
      %726 = vst.msk [vmem:[%s172 + $0xc0] sm:$0xff] %vm206, %v694
      %727 = vst.msk [vmem:[%s172 + $0xc8] sm:$0xff] %vm206, %v695
      %728 = vst.msk [vmem:[%s172 + $0xd0] sm:$0xff] %vm206, %v696
      %729 = vst.msk [vmem:[%s172 + $0xd8] sm:$0xff] %vm206, %v697
      %730 = vst.msk [vmem:[%s172 + $0xe0] sm:$0xff] %vm206, %v698
      %731 = vst.msk [vmem:[%s172 + $0xe8] sm:$0xff] %vm206, %v699
      %732 = vst.msk [vmem:[%s172 + $0xf0] sm:$0xff] %vm206, %v700
      %733 = vst.msk [vmem:[%s172 + $0xf8] sm:$0xff] %vm206, %v701
      %s734 = smul.u32 32, %s14
      %p735 = scmp.lt.s32.totalorder %s734, 63
      %s736 = scalar_select %p735, %s734, 63
      %s737 = smul.addr %s736, 8
      %s738 = scalar_lea.vmem %s3, %s737
      // Predicated region
      $region33: #{tpu_custom_call.1} parent=31 // pred_check
        %p739 = pneg %p100
      $region34: #{tpu_custom_call.1} parent=31 // pred_check_branch
        %741 = sbr.rel (%p739) target = $region36
      $region35: #{tpu_custom_call.1} parent=31 // pred_region
        %s742 = smul.u32 32, %s14
      $region36: #{tpu_custom_call.1} parent=31 // pred_fallthru
        _
    $region32: #{tpu_custom_call.1} parent=5 // pred_fallthru
      _
    %p743 = scmp.le.s32.totalorder 2, %s9
    // Predicated region
    $region37: #{tpu_custom_call.1} parent=5 // pred_check
      %p744 = pneg %p743
    $region38: #{tpu_custom_call.1} parent=5 // pred_check_branch
      %746 = sbr.rel (%p744) target = $region40
    $region39: #{tpu_custom_call.1} parent=5 // pred_region
      %s747 = ssub.s32 %s9, 2
      // Predicated region
      $region41: #{tpu_custom_call.1} parent=39 // pred_check
        %p748 = pneg %p106
      $region42: #{tpu_custom_call.1} parent=39 // pred_check_branch
        %750 = sbr.rel (%p748) target = $region44
      $region43: #{tpu_custom_call.1} parent=39 // pred_region
        %s751 = smul.u32 32, %s15
        %p752 = scmp.lt.s32.totalorder %s751, 63
        %s753 = scalar_select %p752, %s751, 63
        %s754 = smul.addr %s753, 8
        %s755 = scalar_lea.vmem %s3, %s754
      $region44: #{tpu_custom_call.1} parent=39 // pred_fallthru
        _
    $region40: #{tpu_custom_call.1} parent=5 // pred_fallthru
      _
  $region6: #{tpu_custom_call.1} parent=0 // loop_footer
    %s13 = sadd.s32 1, %s9
  $region7: #{tpu_custom_call.1} parent=0 // loop_footer_branch
    %8 = sbr.rel target = $region3
  $region8: #{tpu_custom_call.1} parent=0 // loop_exit
    _

</llo_original>
